<compile_context>
chip_gen: v7x
topology: tpu7x:2x2x1
jax: 0.10.0
libtpu: 0.0.40
codegen_flags: <defaults>
</compile_context>

<pallas_src>
import functools

import jax
import jax.numpy as jnp
from jax.experimental import pallas as pl
from jax.experimental.pallas import tpu as pltpu


def conv_same_padding(in_size: int, kernel: int, stride: int = 1, dilation: int = 1):
    effective_filter_size = (kernel - 1) * dilation + 1
    out_size = (in_size + stride - 1) // stride
    padding_needed = max(0, (out_size - 1) * stride + effective_filter_size - in_size)
    if padding_needed % 2 == 0:
        return padding_needed // 2, padding_needed // 2
    return (padding_needed - 1) // 2, (padding_needed + 1) // 2


def _preresnet_block_kernel(x_ref, w_ref, b_ref, scale_ref, shift_ref, mask_ref,
                            o_ref, *, N, K, H, W, pad_top, pad_left):
    """Single grid step; batch collapsed onto the lane axis.

    x_ref:     (C, N*H*W)   f32   input, lane index = n*HW + h*W + w
    w_ref:     (F, K*K*C)   bf16  conv weights, im2col column order (ky, kx, c)
    b_ref:     (F, 1)       f32   conv bias
    scale_ref: (C, 1)       f32   folded BatchNorm scale  (gamma / sqrt(var+eps))
    shift_ref: (C, 1)       f32   folded BatchNorm shift  (beta - mean*scale)
    mask_ref:  (K*K, N*H*W) f32   per-tap validity masks (1 inside image, 0 in halo)
    o_ref:     (N, F, H*W)  f32   output (channel-major -> NCHW via pure reshape)
    """
    HW = H * W
    L = x_ref.shape[1]                     # N * H * W (lane axis)

    # 1) norm1: eval-mode BatchNorm2d folded to a per-channel affine (f32 VPU).
    y = x_ref[...] * scale_ref[...] + shift_ref[...]                      # (C, L)

    # 2) activation1 = torch.nn.Identity (module default): nothing to do.

    # 3+4) pad1 + conv1 im2col built entirely in registers: each tap (ky, kx)
    #      is a static lane-roll (XLU) of the flat (C, L) plane, zeroed at the
    #      "same"-padding border / image boundary by a precomputed mask.
    pieces = []
    for ky in range(K):
        for kx in range(K):
            t = ky * K + kx
            s = (ky - pad_top) * W + (kx - pad_left)       # static lane shift
            if s == 0:
                pieces.append(y)                           # centre tap: mask is all ones
            else:
                rolled = pltpu.roll(y, shift=(-s) % L, axis=1)
                pieces.append(rolled * mask_ref[t:t + 1, :])
    patch = jnp.concatenate(pieces, axis=0)                # (K*K*C, L) f32, in vregs

    # 5) one MXU matmul: (F, K*K*C) @ (K*K*C, L) -> (F, L); bf16 operands,
    #    f32 accumulation.  Lanes stay fully dense (L = N*HW, multiple of 128).
    acc = jnp.dot(w_ref[...], patch.astype(jnp.bfloat16),
                  preferred_element_type=jnp.float32)                      # (F, L)
    res = acc + b_ref[...]

    # 6) per-batch lane-aligned stores so the wrapper only needs a reshape.
    for n in range(N):
        o_ref[n] = res[:, n * HW:(n + 1) * HW].astype(o_ref.dtype)


def preresnet_block(x_nchw, conv_weight_oihw, conv_bias,
                    bn_gamma, bn_beta, bn_mean, bn_var,
                    *, eps=1e-5, kernel_size=3, stride=1):
    assert stride == 1, "this kernel implements the module defaults (stride=1)"
    N, C, H, W = x_nchw.shape
    F = conv_weight_oihw.shape[0]
    K = kernel_size
    HW = H * W
    L = N * HW

    # Fold eval-mode BatchNorm into a per-channel affine.
    scale = bn_gamma / jnp.sqrt(bn_var + eps)
    shift = bn_beta - bn_mean * scale

    p_l, _p_r = conv_same_padding(W, K, stride)   # width  padding (right/bottom halo
    p_t, _p_b = conv_same_padding(H, K, stride)   # is handled by the masks)

    # im2col-ordered weights: OIHW (F,C,K,K) -> (F,K,K,C) -> (F, K*K*C),
    # pre-cast to bf16 in the wrapper (no per-step cast inside the kernel).
    w_mat = jnp.transpose(conv_weight_oihw, (0, 2, 3, 1)).reshape(F, K * K * C)
    w_mat = w_mat.astype(jnp.bfloat16)

    # Per-tap border-validity masks over one image, tiled across the batch
    # along the lane axis (also kills roll wrap-around between images).
    hh = jnp.arange(H)[:, None]
    ww = jnp.arange(W)[None, :]
    mask_rows = []
    for ky in range(K):
        for kx in range(K):
            dy, dx = ky - p_t, kx - p_l
            valid = ((hh + dy >= 0) & (hh + dy < H) &
                     (ww + dx >= 0) & (ww + dx < W))
            mask_rows.append(valid.reshape(HW))
    masks = jnp.tile(jnp.stack(mask_rows, axis=0), (1, N)).astype(jnp.float32)  # (K*K, L)

    # Batch collapsed onto lanes: NCHW -> (C, N, H, W) -> (C, N*H*W).
    x_flat = jnp.transpose(x_nchw, (1, 0, 2, 3)).reshape(C, L).astype(jnp.float32)

    kernel = functools.partial(_preresnet_block_kernel, N=N, K=K, H=H, W=W,
                               pad_top=p_t, pad_left=p_l)

    out_flat = pl.pallas_call(
        kernel,
        out_shape=jax.ShapeDtypeStruct((N, F, HW), jnp.float32),
        grid_spec=pltpu.PrefetchScalarGridSpec(
            num_scalar_prefetch=0,
            grid=(1,),
            in_specs=[
                pl.BlockSpec((C, L), lambda i: (0, 0)),
                pl.BlockSpec((F, K * K * C), lambda i: (0, 0)),
                pl.BlockSpec((F, 1), lambda i: (0, 0)),
                pl.BlockSpec((C, 1), lambda i: (0, 0)),
                pl.BlockSpec((C, 1), lambda i: (0, 0)),
                pl.BlockSpec((K * K, L), lambda i: (0, 0)),
            ],
            out_specs=pl.BlockSpec((N, F, HW), lambda i: (0, 0, 0)),
        ),
        compiler_params=pltpu.CompilerParams(
            dimension_semantics=("arbitrary",),
            vmem_limit_bytes=32 * 1024 * 1024,   # safe on v5e/v6e (128 MiB) and v7x (64 MiB)
        ),
    )(x_flat, w_mat,
      conv_bias.reshape(F, 1).astype(jnp.float32),
      scale.reshape(C, 1).astype(jnp.float32),
      shift.reshape(C, 1).astype(jnp.float32),
      masks)

    # (N, F, H*W) is already channel-major => a pure reshape recovers NCHW.
    return out_flat.reshape(N, F, H, W)


def _reference(x_nchw, conv_weight_oihw, conv_bias,
               bn_gamma, bn_beta, bn_mean, bn_var,
               *, eps=1e-5, kernel_size=3, stride=1):
    scale = bn_gamma / jnp.sqrt(bn_var + eps)
    shift = bn_beta - bn_mean * scale
    y = x_nchw * scale[None, :, None, None] + shift[None, :, None, None]
    p_l, p_r = conv_same_padding(x_nchw.shape[3], kernel_size, stride)
    p_t, p_b = conv_same_padding(x_nchw.shape[2], kernel_size, stride)
    y = jnp.pad(y, ((0, 0), (0, 0), (p_t, p_b), (p_l, p_r)))
    out = jax.lax.conv_general_dilated(
        y, conv_weight_oihw, window_strides=(stride, stride), padding='VALID',
        dimension_numbers=('NCHW', 'OIHW', 'NCHW'))
    return out + conv_bias[None, :, None, None]


if __name__ == "__main__":
    # Small shapes consistent with the module: input_size = (C, H, W) = (4, 16, 16),
    # num_filters = 4 (must equal C for the module's norm1(num_filters) to be valid).
    N, C, H, W = 2, 4, 16, 16
    F, K = 4, 3

    key = jax.random.PRNGKey(0)
    k_x, k_w, k_b, k_g, k_be, k_m, k_v = jax.random.split(key, 7)

    x = jax.random.normal(k_x, (N, C, H, W), jnp.float32)
    conv_weight = jax.random.normal(k_w, (F, C, K, K), jnp.float32) * 0.1   # OIHW
    conv_bias = jax.random.normal(k_b, (F,), jnp.float32) * 0.1
    bn_gamma = 1.0 + 0.1 * jax.random.normal(k_g, (C,), jnp.float32)
    bn_beta = 0.1 * jax.random.normal(k_be, (C,), jnp.float32)
    bn_mean = 0.1 * jax.random.normal(k_m, (C,), jnp.float32)
    bn_var = jax.random.uniform(k_v, (C,), jnp.float32, 0.5, 1.5)

    out = preresnet_block(x, conv_weight, conv_bias,
                          bn_gamma, bn_beta, bn_mean, bn_var)
    out = jax.block_until_ready(out)

    ref = _reference(x, conv_weight, conv_bias,
                     bn_gamma, bn_beta, bn_mean, bn_var)
    assert out.shape == (N, F, H, W), out.shape
    # bf16 MXU operands (f32 accumulate) => tolerance sized for bf16's ~2^-9
    # relative rounding accumulated over the K*K*C = 36-term contraction.
    err = float(jnp.max(jnp.abs(out - ref)))
    assert jnp.allclose(out, ref, atol=5e-2, rtol=5e-2), err

    print("KERNEL_OK")
</pallas_src>

<mosaic_0001>
module attributes {stable_mosaic.version = 11 : i64} {
  func.func @_preresnet_block_kernel(%arg0: i32, %arg1: memref<4x512xf32, #tpu.memory_space<vmem>>, %arg2: memref<4x36xbf16, #tpu.memory_space<vmem>>, %arg3: memref<4x1xf32, #tpu.memory_space<vmem>>, %arg4: memref<4x1xf32, #tpu.memory_space<vmem>>, %arg5: memref<4x1xf32, #tpu.memory_space<vmem>>, %arg6: memref<9x512xf32, #tpu.memory_space<vmem>>, %arg7: memref<2x4x256xf32, #tpu.memory_space<vmem>>) attributes {dimension_semantics = [#tpu.dimension_semantics<arbitrary>], iteration_bounds = array<i64: 1>, scalar_prefetch = 0 : i64, scratch_operands = 0 : i64, tpu.core_type = #tpu.core_type<tc>, window_params = [{pipeline_mode = #tpu.pipeline_mode<synchronous>, transform_indices = @transform_0, window_bounds = array<i64: 4, 512>}, {pipeline_mode = #tpu.pipeline_mode<synchronous>, transform_indices = @transform_1, window_bounds = array<i64: 4, 36>}, {pipeline_mode = #tpu.pipeline_mode<synchronous>, transform_indices = @transform_2, window_bounds = array<i64: 4, 1>}, {pipeline_mode = #tpu.pipeline_mode<synchronous>, transform_indices = @transform_3, window_bounds = array<i64: 4, 1>}, {pipeline_mode = #tpu.pipeline_mode<synchronous>, transform_indices = @transform_4, window_bounds = array<i64: 4, 1>}, {pipeline_mode = #tpu.pipeline_mode<synchronous>, transform_indices = @transform_5, window_bounds = array<i64: 9, 512>}, {pipeline_mode = #tpu.pipeline_mode<synchronous>, transform_indices = @transform_6, window_bounds = array<i64: 2, 4, 256>}]} {
    %c0 = arith.constant 0 : index
    %c0_0 = arith.constant 0 : index
    %0 = vector.load %arg1[%c0, %c0_0] : memref<4x512xf32, #tpu.memory_space<vmem>>, vector<4x512xf32>
    %c0_1 = arith.constant 0 : index
    %c0_2 = arith.constant 0 : index
    %1 = vector.load %arg4[%c0_1, %c0_2] : memref<4x1xf32, #tpu.memory_space<vmem>>, vector<4x1xf32>
    %2 = vector.broadcast %1 : vector<4x1xf32> to vector<4x512xf32>
    %3 = arith.mulf %0, %2 : vector<4x512xf32>
    %c0_3 = arith.constant 0 : index
    %c0_4 = arith.constant 0 : index
    %4 = vector.load %arg5[%c0_3, %c0_4] : memref<4x1xf32, #tpu.memory_space<vmem>>, vector<4x1xf32>
    %5 = vector.broadcast %4 : vector<4x1xf32> to vector<4x512xf32>
    %6 = arith.addf %3, %5 : vector<4x512xf32>
    %c17_i32 = arith.constant 17 : i32
    %7 = tpu.dynamic_rotate %6 by %c17_i32 dim 1 : vector<4x512xf32>, i32 -> vector<4x512xf32>
    %c0_5 = arith.constant 0 : index
    %c0_6 = arith.constant 0 : index
    %8 = vector.load %arg6[%c0_5, %c0_6] : memref<9x512xf32, #tpu.memory_space<vmem>>, vector<1x512xf32>
    %9 = vector.broadcast %8 : vector<1x512xf32> to vector<4x512xf32>
    %10 = arith.mulf %7, %9 : vector<4x512xf32>
    %c16_i32 = arith.constant 16 : i32
    %11 = tpu.dynamic_rotate %6 by %c16_i32 dim 1 : vector<4x512xf32>, i32 -> vector<4x512xf32>
    %c1 = arith.constant 1 : index
    %c0_7 = arith.constant 0 : index
    %12 = vector.load %arg6[%c1, %c0_7] : memref<9x512xf32, #tpu.memory_space<vmem>>, vector<1x512xf32>
    %13 = vector.broadcast %12 : vector<1x512xf32> to vector<4x512xf32>
    %14 = arith.mulf %11, %13 : vector<4x512xf32>
    %c15_i32 = arith.constant 15 : i32
    %15 = tpu.dynamic_rotate %6 by %c15_i32 dim 1 : vector<4x512xf32>, i32 -> vector<4x512xf32>
    %c2 = arith.constant 2 : index
    %c0_8 = arith.constant 0 : index
    %16 = vector.load %arg6[%c2, %c0_8] : memref<9x512xf32, #tpu.memory_space<vmem>>, vector<1x512xf32>
    %17 = vector.broadcast %16 : vector<1x512xf32> to vector<4x512xf32>
    %18 = arith.mulf %15, %17 : vector<4x512xf32>
    %c1_i32 = arith.constant 1 : i32
    %19 = tpu.dynamic_rotate %6 by %c1_i32 dim 1 : vector<4x512xf32>, i32 -> vector<4x512xf32>
    %c3 = arith.constant 3 : index
    %c0_9 = arith.constant 0 : index
    %20 = vector.load %arg6[%c3, %c0_9] : memref<9x512xf32, #tpu.memory_space<vmem>>, vector<1x512xf32>
    %21 = vector.broadcast %20 : vector<1x512xf32> to vector<4x512xf32>
    %22 = arith.mulf %19, %21 : vector<4x512xf32>
    %c511_i32 = arith.constant 511 : i32
    %23 = tpu.dynamic_rotate %6 by %c511_i32 dim 1 : vector<4x512xf32>, i32 -> vector<4x512xf32>
    %c5 = arith.constant 5 : index
    %c0_10 = arith.constant 0 : index
    %24 = vector.load %arg6[%c5, %c0_10] : memref<9x512xf32, #tpu.memory_space<vmem>>, vector<1x512xf32>
    %25 = vector.broadcast %24 : vector<1x512xf32> to vector<4x512xf32>
    %26 = arith.mulf %23, %25 : vector<4x512xf32>
    %c497_i32 = arith.constant 497 : i32
    %27 = tpu.dynamic_rotate %6 by %c497_i32 dim 1 : vector<4x512xf32>, i32 -> vector<4x512xf32>
    %c6 = arith.constant 6 : index
    %c0_11 = arith.constant 0 : index
    %28 = vector.load %arg6[%c6, %c0_11] : memref<9x512xf32, #tpu.memory_space<vmem>>, vector<1x512xf32>
    %29 = vector.broadcast %28 : vector<1x512xf32> to vector<4x512xf32>
    %30 = arith.mulf %27, %29 : vector<4x512xf32>
    %c496_i32 = arith.constant 496 : i32
    %31 = tpu.dynamic_rotate %6 by %c496_i32 dim 1 : vector<4x512xf32>, i32 -> vector<4x512xf32>
    %c7 = arith.constant 7 : index
    %c0_12 = arith.constant 0 : index
    %32 = vector.load %arg6[%c7, %c0_12] : memref<9x512xf32, #tpu.memory_space<vmem>>, vector<1x512xf32>
    %33 = vector.broadcast %32 : vector<1x512xf32> to vector<4x512xf32>
    %34 = arith.mulf %31, %33 : vector<4x512xf32>
    %c495_i32 = arith.constant 495 : i32
    %35 = tpu.dynamic_rotate %6 by %c495_i32 dim 1 : vector<4x512xf32>, i32 -> vector<4x512xf32>
    %c8 = arith.constant 8 : index
    %c0_13 = arith.constant 0 : index
    %36 = vector.load %arg6[%c8, %c0_13] : memref<9x512xf32, #tpu.memory_space<vmem>>, vector<1x512xf32>
    %37 = vector.broadcast %36 : vector<1x512xf32> to vector<4x512xf32>
    %38 = arith.mulf %35, %37 : vector<4x512xf32>
    %39 = tpu.concatenate %10, %14, %18, %22, %6, %26, %30, %34, %38 in 0 : vector<4x512xf32>, vector<4x512xf32>, vector<4x512xf32>, vector<4x512xf32>, vector<4x512xf32>, vector<4x512xf32>, vector<4x512xf32>, vector<4x512xf32>, vector<4x512xf32> -> vector<36x512xf32>
    %c0_14 = arith.constant 0 : index
    %c0_15 = arith.constant 0 : index
    %40 = vector.load %arg2[%c0_14, %c0_15] : memref<4x36xbf16, #tpu.memory_space<vmem>>, vector<4x36xbf16>
    %41 = arith.truncf %39 : vector<36x512xf32> to vector<36x512xbf16>
    %cst = arith.constant dense<0.000000e+00> : vector<4x512xf32>
    %42 = tpu.matmul %40, %41, %cst {dimension_numbers = #tpu.dot_dimension_numbers<[1], [0], [0], [1], [0, 0, 1, 1], [], []>} : vector<4x36xbf16>, vector<36x512xbf16>, vector<4x512xf32> -> vector<4x512xf32>
    %c0_16 = arith.constant 0 : index
    %c0_17 = arith.constant 0 : index
    %43 = vector.load %arg3[%c0_16, %c0_17] : memref<4x1xf32, #tpu.memory_space<vmem>>, vector<4x1xf32>
    %44 = vector.broadcast %43 : vector<4x1xf32> to vector<4x512xf32>
    %45 = arith.addf %42, %44 : vector<4x512xf32>
    %46 = vector.extract_strided_slice %45 {offsets = [0, 0], sizes = [4, 256], strides = [1, 1]} : vector<4x512xf32> to vector<4x256xf32>
    %c0_18 = arith.constant 0 : index
    %c0_19 = arith.constant 0 : index
    %c0_20 = arith.constant 0 : index
    %47 = vector.load %arg7[%c0_18, %c0_19, %c0_20] : memref<2x4x256xf32, #tpu.memory_space<vmem>>, vector<1x4x256xf32>
    %48 = vector.shape_cast %47 : vector<1x4x256xf32> to vector<4x256xf32>
    %49 = vector.shape_cast %46 : vector<4x256xf32> to vector<1x4x256xf32>
    tpu.vector_store %arg7[%c0_18, %c0_19, %c0_20], %49 {strides = array<i32>} : memref<2x4x256xf32, #tpu.memory_space<vmem>>, vector<1x4x256xf32>,
    %50 = vector.extract_strided_slice %45 {offsets = [0, 256], sizes = [4, 256], strides = [1, 1]} : vector<4x512xf32> to vector<4x256xf32>
    %c1_21 = arith.constant 1 : index
    %c0_22 = arith.constant 0 : index
    %c0_23 = arith.constant 0 : index
    %51 = vector.load %arg7[%c1_21, %c0_22, %c0_23] : memref<2x4x256xf32, #tpu.memory_space<vmem>>, vector<1x4x256xf32>
    %52 = vector.shape_cast %51 : vector<1x4x256xf32> to vector<4x256xf32>
    %53 = vector.shape_cast %50 : vector<4x256xf32> to vector<1x4x256xf32>
    tpu.vector_store %arg7[%c1_21, %c0_22, %c0_23], %53 {strides = array<i32>} : memref<2x4x256xf32, #tpu.memory_space<vmem>>, vector<1x4x256xf32>,
    return
  }
  func.func @transform_0(%arg0: i32) -> (i32, i32) {
    %c0_i32 = arith.constant 0 : i32
    %c0_i32_0 = arith.constant 0 : i32
    %c0_i32_1 = arith.constant 0 : i32
    return %c0_i32, %c0_i32_0 : i32, i32
  }
  func.func @transform_1(%arg0: i32) -> (i32, i32) {
    %c0_i32 = arith.constant 0 : i32
    %c0_i32_0 = arith.constant 0 : i32
    %c0_i32_1 = arith.constant 0 : i32
    return %c0_i32, %c0_i32_0 : i32, i32
  }
  func.func @transform_2(%arg0: i32) -> (i32, i32) {
    %c0_i32 = arith.constant 0 : i32
    %c0_i32_0 = arith.constant 0 : i32
    %c0_i32_1 = arith.constant 0 : i32
    return %c0_i32, %c0_i32_0 : i32, i32
  }
  func.func @transform_3(%arg0: i32) -> (i32, i32) {
    %c0_i32 = arith.constant 0 : i32
    %c0_i32_0 = arith.constant 0 : i32
    %c0_i32_1 = arith.constant 0 : i32
    return %c0_i32, %c0_i32_0 : i32, i32
  }
  func.func @transform_4(%arg0: i32) -> (i32, i32) {
    %c0_i32 = arith.constant 0 : i32
    %c0_i32_0 = arith.constant 0 : i32
    %c0_i32_1 = arith.constant 0 : i32
    return %c0_i32, %c0_i32_0 : i32, i32
  }
  func.func @transform_5(%arg0: i32) -> (i32, i32) {
    %c0_i32 = arith.constant 0 : i32
    %c0_i32_0 = arith.constant 0 : i32
    %c0_i32_1 = arith.constant 0 : i32
    return %c0_i32, %c0_i32_0 : i32, i32
  }
  func.func @transform_6(%arg0: i32) -> (i32, i32, i32) {
    %c0_i32 = arith.constant 0 : i32
    %c0_i32_0 = arith.constant 0 : i32
    %c0_i32_1 = arith.constant 0 : i32
    %c0_i32_2 = arith.constant 0 : i32
    return %c0_i32, %c0_i32_0, %c0_i32_1 : i32, i32, i32
  }
}

</mosaic_0001>

<llo_original>
// kernel: tpu_custom_call.1
$region0: #{tpu_custom_call.1}
  #allocation0 [shape = 'u32[]', space=smem, size = 0x4, offset = 0x4, fixed_abs, tag = 'smem constant byte address 0x4 - core index']
  #allocation1 [shape = 'u32[144,128]{1,0:T(1,128)}', space=vmem, size = 0x12000, scoped, tag = 'internal scratch']
  %s0 = inlined_call_operand.hbm [shape: f32[4,512], index: 0, kind: input, shape index: {}]
  %s1 = inlined_call_operand.vmem [shape: bf16[4,36], index: 1, kind: input, shape index: {}]
  %s2 = inlined_call_operand.vmem [shape: f32[4,1], index: 2, kind: input, shape index: {}]
  %s3 = inlined_call_operand.vmem [shape: f32[4,1], index: 3, kind: input, shape index: {}]
  %s4 = inlined_call_operand.vmem [shape: f32[4,1], index: 4, kind: input, shape index: {}]
  %s5 = inlined_call_operand.hbm [shape: f32[9,512], index: 5, kind: input, shape index: {}]
  %s6 = inlined_call_operand.hbm [shape: f32[2,4,256], index: 6, kind: output, shape index: {}]
  %s7 = sld [smem:[#allocation0]]
  $region42: #{tpu_custom_call.1} parent=0
    _
  %s9 = ssub.s32 1, %s7
  %s10 = scalar_select 0, %s9, %s7
  $region1: #{tpu_custom_call.1} parent=0
    #allocation2 [shape = 'u8[8192]{0}', space=vmem, size = 0x2000, scoped, tag = 'input window, operand 0, single buffered']
    #allocation3 [shape = 's32[1]{0}', space=sflag, size = 0x4, scoped, tag = 'scoped memory for tpu_custom_call.1']
    #allocation4 [shape = 's32[1]{0}', space=sflag, size = 0x4, scoped, tag = 'scoped memory for tpu_custom_call.1']
    #allocation5 [shape = 'u8[32768]{0}', space=vmem, size = 0x8000, scoped, tag = 'input window, operand 5, single buffered']
    #allocation6 [shape = 's32[1]{0}', space=sflag, size = 0x4, scoped, tag = 'scoped memory for tpu_custom_call.1']
    #allocation7 [shape = 'u8[8192]{0}', space=vmem, size = 0x2000, scoped, tag = 'output window, operand 0, single buffered']
    %11 = vsyncpa [#allocation3], 0
    %12 = vsyncpa [#allocation6], 0
    %13 = vsyncpa [#allocation4], 0
    // Predicated region
    $region2: #{tpu_custom_call.1} parent=1 // pred_check
      _
    $region3: #{tpu_custom_call.1} parent=1 // pred_check_branch
      %15 = sbr.rel (0) target = $region5
    $region4: #{tpu_custom_call.1} parent=1 // pred_region
      %s17 = ssub.s32 256, 256
      %18 = vsyncadd [#allocation3], %s17
      %s20 = sshll.u32 [#allocation2], 4
      %s21 = int_to_ptr.vmem [resolvable:$true] %s20
      %23 = dma.hbm_to_vmem [thread:$0]  %s0, 256, %s21, [#allocation3]
    $region5: #{tpu_custom_call.1} parent=1 // pred_fallthru
      _
    // Predicated region
    $region6: #{tpu_custom_call.1} parent=1 // pred_check
      _
    $region7: #{tpu_custom_call.1} parent=1 // pred_check_branch
      %25 = sbr.rel (0) target = $region9
    $region8: #{tpu_custom_call.1} parent=1 // pred_region
      _
    $region9: #{tpu_custom_call.1} parent=1 // pred_fallthru
      _
    // Predicated region
    $region10: #{tpu_custom_call.1} parent=1 // pred_check
      _
    $region11: #{tpu_custom_call.1} parent=1 // pred_check_branch
      %27 = sbr.rel (0) target = $region13
    $region12: #{tpu_custom_call.1} parent=1 // pred_region
      _
    $region13: #{tpu_custom_call.1} parent=1 // pred_fallthru
      _
    // Predicated region
    $region14: #{tpu_custom_call.1} parent=1 // pred_check
      _
    $region15: #{tpu_custom_call.1} parent=1 // pred_check_branch
      %29 = sbr.rel (0) target = $region17
    $region16: #{tpu_custom_call.1} parent=1 // pred_region
      _
    $region17: #{tpu_custom_call.1} parent=1 // pred_fallthru
      _
    // Predicated region
    $region18: #{tpu_custom_call.1} parent=1 // pred_check
      _
    $region19: #{tpu_custom_call.1} parent=1 // pred_check_branch
      %31 = sbr.rel (0) target = $region21
    $region20: #{tpu_custom_call.1} parent=1 // pred_region
      _
    $region21: #{tpu_custom_call.1} parent=1 // pred_fallthru
      _
    // Predicated region
    $region22: #{tpu_custom_call.1} parent=1 // pred_check
      _
    $region23: #{tpu_custom_call.1} parent=1 // pred_check_branch
      %33 = sbr.rel (0) target = $region25
    $region24: #{tpu_custom_call.1} parent=1 // pred_region
      %s35 = ssub.s32 1024, 1024
      %36 = vsyncadd [#allocation6], %s35
      %s37 = sshll.u32 [#allocation5], 4
      %s38 = int_to_ptr.vmem [resolvable:$true] %s37
      %43 = dma.hbm_to_vmem [thread:$0]  %s5, 1024, %s38, [#allocation6], 512, 512, 32
    $region25: #{tpu_custom_call.1} parent=1 // pred_fallthru
      _
    // Predicated region
    $region26: #{tpu_custom_call.1} parent=1 // pred_check
      _
    $region27: #{tpu_custom_call.1} parent=1 // pred_check_branch
      %45 = sbr.rel (0) target = $region29
    $region28: #{tpu_custom_call.1} parent=1 // pred_region
      %46 = dma.done [#allocation3], 256
    $region29: #{tpu_custom_call.1} parent=1 // pred_fallthru
      _
    // Predicated region
    $region30: #{tpu_custom_call.1} parent=1 // pred_check
      _
    $region31: #{tpu_custom_call.1} parent=1 // pred_check_branch
      %48 = sbr.rel (0) target = $region33
    $region32: #{tpu_custom_call.1} parent=1 // pred_region
      %49 = dma.done [#allocation6], 1024
    $region33: #{tpu_custom_call.1} parent=1 // pred_fallthru
      _
    %v51 = vld [vmem:[#allocation2] sm:$0xff]
    %v52 = vld [vmem:[#allocation2 + $0x8] sm:$0xff]
    %v53 = vld [vmem:[%s3] sm:$0xf]
    %55 = vset.pattern.permute.xlu0 0
    %56 = vperm.xlu0 %55, %v53
    %v57 = vpop.permute.xlu0 %56
    %v59 = vunpack.c.l.s4 839922192
    %v60 = vunpack.c.0.s8 %v59
    %v61 = vlaneseq
    %v62 = vshrl.u32 %v61, 7
    %v63 = vsub.s32 %v60, %v62
    %v64 = vrot.slane %v57, %v63
    %v66 = vmul.f32 %v51, %v64
    %v67 = vmul.f32 %v52, %v64
    %v68 = vld [vmem:[%s4] sm:$0xf]
    %70 = vset.pattern.permute.xlu0 0
    %71 = vperm.xlu0 %70, %v68
    %v72 = vpop.permute.xlu0 %71
    %v74 = vunpack.c.l.s4 839922192
    %v75 = vunpack.c.0.s8 %v74
    %v76 = vlaneseq
    %v77 = vshrl.u32 %v76, 7
    %v78 = vsub.s32 %v75, %v77
    %v79 = vrot.slane %v72, %v78
    %v81 = vadd.f32 %v66, %v79
    %v82 = vadd.f32 %v67, %v79
    %v85 = vcombine.high %v81, %v81
    %v86 = vcombine.high %v82, %v82
    %89 = vrot.lane.b32.xlu0 %v81, 17
    %v90 = vpop.permute.xlu0 %89
    %91 = vrot.lane.b32.xlu0 %v85, 17
    %v92 = vpop.permute.xlu0 %91
    %93 = vrot.lane.b32.xlu0 %v82, 17
    %v94 = vpop.permute.xlu0 %93
    %95 = vrot.lane.b32.xlu0 %v86, 17
    %v96 = vpop.permute.xlu0 %95
    %v97 = vlaneseq
    %v98 = vand.u32 %v97, 127
    %vm99 = vcmp.lt.s32.totalorder %v98, 17
    %v100 = vsel %vm99, %v94, %v96
    %v101 = vsel %vm99, %v92, %v94
    %v102 = vsel %vm99, %v90, %v92
    %v103 = vsel %vm99, %v96, %v90
    %v104 = vld [vmem:[#allocation5] ss:$8 sm:$0xf]
    %v106 = vlaneseq
    %v107 = vshrl.u32 %v106, 7
    %v108 = vsub.s32 0, %v107
    %v109 = vrot.slane %v104, %v108
    %v110 = vlaneseq
    %v111 = vshrl.u32 %v110, 7
    %v112 = vsub.s32 1, %v111
    %v113 = vrot.slane %v104, %v112
    %v114 = vlaneseq
    %v115 = vshrl.u32 %v114, 7
    %v116 = vsub.s32 2, %v115
    %v117 = vrot.slane %v104, %v116
    %v118 = vlaneseq
    %v119 = vshrl.u32 %v118, 7
    %v120 = vsub.s32 3, %v119
    %v121 = vrot.slane %v104, %v120
    %v126 = vmul.f32 %v103, %v109
    %v127 = vmul.f32 %v102, %v113
    %v128 = vmul.f32 %v101, %v117
    %v129 = vmul.f32 %v100, %v121
    %130 = vrot.lane.b32.xlu0 %v81, 16
    %v131 = vpop.permute.xlu0 %130
    %132 = vrot.lane.b32.xlu0 %v85, 16
    %v133 = vpop.permute.xlu0 %132
    %134 = vrot.lane.b32.xlu0 %v82, 16
    %v135 = vpop.permute.xlu0 %134
    %136 = vrot.lane.b32.xlu0 %v86, 16
    %v137 = vpop.permute.xlu0 %136
    %vm138 = vcmp.lt.s32.totalorder %v98, 16
    %v139 = vsel %vm138, %v135, %v137
    %v140 = vsel %vm138, %v133, %v135
    %v141 = vsel %vm138, %v131, %v133
    %v142 = vsel %vm138, %v137, %v131
    %s143 = scalar_lea.vmem [#allocation5], 1
    %v144 = vld [vmem:[%s143] ss:$8 sm:$0xf]
    %v146 = vlaneseq
    %v147 = vshrl.u32 %v146, 7
    %v148 = vsub.s32 0, %v147
    %v149 = vrot.slane %v144, %v148
    %v150 = vlaneseq
    %v151 = vshrl.u32 %v150, 7
    %v152 = vsub.s32 1, %v151
    %v153 = vrot.slane %v144, %v152
    %v154 = vlaneseq
    %v155 = vshrl.u32 %v154, 7
    %v156 = vsub.s32 2, %v155
    %v157 = vrot.slane %v144, %v156
    %v158 = vlaneseq
    %v159 = vshrl.u32 %v158, 7
    %v160 = vsub.s32 3, %v159
    %v161 = vrot.slane %v144, %v160
    %v166 = vmul.f32 %v142, %v149
    %v167 = vmul.f32 %v141, %v153
    %v168 = vmul.f32 %v140, %v157
    %v169 = vmul.f32 %v139, %v161
    %170 = vrot.lane.b32.xlu0 %v81, 15
    %v171 = vpop.permute.xlu0 %170
    %172 = vrot.lane.b32.xlu0 %v85, 15
    %v173 = vpop.permute.xlu0 %172
    %174 = vrot.lane.b32.xlu0 %v82, 15
    %v175 = vpop.permute.xlu0 %174
    %176 = vrot.lane.b32.xlu0 %v86, 15
    %v177 = vpop.permute.xlu0 %176
    %vm178 = vcmp.lt.s32.totalorder %v98, 15
    %v179 = vsel %vm178, %v175, %v177
    %v180 = vsel %vm178, %v173, %v175
    %v181 = vsel %vm178, %v171, %v173
    %v182 = vsel %vm178, %v177, %v171
    %s183 = scalar_lea.vmem [#allocation5], 2
    %v184 = vld [vmem:[%s183] ss:$8 sm:$0xf]
    %v186 = vlaneseq
    %v187 = vshrl.u32 %v186, 7
    %v188 = vsub.s32 0, %v187
    %v189 = vrot.slane %v184, %v188
    %v190 = vlaneseq
    %v191 = vshrl.u32 %v190, 7
    %v192 = vsub.s32 1, %v191
    %v193 = vrot.slane %v184, %v192
    %v194 = vlaneseq
    %v195 = vshrl.u32 %v194, 7
    %v196 = vsub.s32 2, %v195
    %v197 = vrot.slane %v184, %v196
    %v198 = vlaneseq
    %v199 = vshrl.u32 %v198, 7
    %v200 = vsub.s32 3, %v199
    %v201 = vrot.slane %v184, %v200
    %v206 = vmul.f32 %v182, %v189
    %v207 = vmul.f32 %v181, %v193
    %v208 = vmul.f32 %v180, %v197
    %v209 = vmul.f32 %v179, %v201
    %210 = vrot.lane.b32.xlu0 %v81, 1
    %v211 = vpop.permute.xlu0 %210
    %212 = vrot.lane.b32.xlu0 %v85, 1
    %v213 = vpop.permute.xlu0 %212
    %214 = vrot.lane.b32.xlu0 %v82, 1
    %v215 = vpop.permute.xlu0 %214
    %216 = vrot.lane.b32.xlu0 %v86, 1
    %v217 = vpop.permute.xlu0 %216
    %vm218 = vcmp.lt.s32.totalorder %v98, 1
    %v219 = vsel %vm218, %v215, %v217
    %v220 = vsel %vm218, %v213, %v215
    %v221 = vsel %vm218, %v211, %v213
    %v222 = vsel %vm218, %v217, %v211
    %s223 = scalar_lea.vmem [#allocation5], 3
    %v224 = vld [vmem:[%s223] ss:$8 sm:$0xf]
    %v226 = vlaneseq
    %v227 = vshrl.u32 %v226, 7
    %v228 = vsub.s32 0, %v227
    %v229 = vrot.slane %v224, %v228
    %v230 = vlaneseq
    %v231 = vshrl.u32 %v230, 7
    %v232 = vsub.s32 1, %v231
    %v233 = vrot.slane %v224, %v232
    %v234 = vlaneseq
    %v235 = vshrl.u32 %v234, 7
    %v236 = vsub.s32 2, %v235
    %v237 = vrot.slane %v224, %v236
    %v238 = vlaneseq
    %v239 = vshrl.u32 %v238, 7
    %v240 = vsub.s32 3, %v239
    %v241 = vrot.slane %v224, %v240
    %v246 = vmul.f32 %v222, %v229
    %v247 = vmul.f32 %v221, %v233
    %v248 = vmul.f32 %v220, %v237
    %v249 = vmul.f32 %v219, %v241
    %250 = vrot.lane.b32.xlu0 %v81, 127
    %v251 = vpop.permute.xlu0 %250
    %252 = vrot.lane.b32.xlu0 %v85, 127
    %v253 = vpop.permute.xlu0 %252
    %254 = vrot.lane.b32.xlu0 %v82, 127
    %v255 = vpop.permute.xlu0 %254
    %256 = vrot.lane.b32.xlu0 %v86, 127
    %v257 = vpop.permute.xlu0 %256
    %vm258 = vcmp.lt.s32.totalorder %v98, 127
    %v259 = vsel %vm258, %v255, %v257
    %v260 = vsel %vm258, %v253, %v255
    %v261 = vsel %vm258, %v251, %v253
    %v262 = vsel %vm258, %v257, %v251
    %s263 = scalar_lea.vmem [#allocation5], 5
    %v264 = vld [vmem:[%s263] ss:$8 sm:$0xf]
    %v266 = vlaneseq
    %v267 = vshrl.u32 %v266, 7
    %v268 = vsub.s32 0, %v267
    %v269 = vrot.slane %v264, %v268
    %v270 = vlaneseq
    %v271 = vshrl.u32 %v270, 7
    %v272 = vsub.s32 1, %v271
    %v273 = vrot.slane %v264, %v272
    %v274 = vlaneseq
    %v275 = vshrl.u32 %v274, 7
    %v276 = vsub.s32 2, %v275
    %v277 = vrot.slane %v264, %v276
    %v278 = vlaneseq
    %v279 = vshrl.u32 %v278, 7
    %v280 = vsub.s32 3, %v279
    %v281 = vrot.slane %v264, %v280
    %v286 = vmul.f32 %v261, %v269
    %v287 = vmul.f32 %v260, %v273
    %v288 = vmul.f32 %v259, %v277
    %v289 = vmul.f32 %v262, %v281
    %290 = vrot.lane.b32.xlu0 %v81, 113
    %v291 = vpop.permute.xlu0 %290
    %292 = vrot.lane.b32.xlu0 %v85, 113
    %v293 = vpop.permute.xlu0 %292
    %294 = vrot.lane.b32.xlu0 %v82, 113
    %v295 = vpop.permute.xlu0 %294
    %296 = vrot.lane.b32.xlu0 %v86, 113
    %v297 = vpop.permute.xlu0 %296
    %vm298 = vcmp.lt.s32.totalorder %v98, 113
    %v299 = vsel %vm298, %v295, %v297
    %v300 = vsel %vm298, %v293, %v295
    %v301 = vsel %vm298, %v291, %v293
    %v302 = vsel %vm298, %v297, %v291
    %s303 = scalar_lea.vmem [#allocation5], 6
    %v304 = vld [vmem:[%s303] ss:$8 sm:$0xf]
    %v306 = vlaneseq
    %v307 = vshrl.u32 %v306, 7
    %v308 = vsub.s32 0, %v307
    %v309 = vrot.slane %v304, %v308
    %v310 = vlaneseq
    %v311 = vshrl.u32 %v310, 7
    %v312 = vsub.s32 1, %v311
    %v313 = vrot.slane %v304, %v312
    %v314 = vlaneseq
    %v315 = vshrl.u32 %v314, 7
    %v316 = vsub.s32 2, %v315
    %v317 = vrot.slane %v304, %v316
    %v318 = vlaneseq
    %v319 = vshrl.u32 %v318, 7
    %v320 = vsub.s32 3, %v319
    %v321 = vrot.slane %v304, %v320
    %v326 = vmul.f32 %v301, %v309
    %v327 = vmul.f32 %v300, %v313
    %v328 = vmul.f32 %v299, %v317
    %v329 = vmul.f32 %v302, %v321
    %330 = vrot.lane.b32.xlu0 %v81, 112
    %v331 = vpop.permute.xlu0 %330
    %332 = vrot.lane.b32.xlu0 %v85, 112
    %v333 = vpop.permute.xlu0 %332
    %334 = vrot.lane.b32.xlu0 %v82, 112
    %v335 = vpop.permute.xlu0 %334
    %336 = vrot.lane.b32.xlu0 %v86, 112
    %v337 = vpop.permute.xlu0 %336
    %vm338 = vcmp.lt.s32.totalorder %v98, 112
    %v339 = vsel %vm338, %v335, %v337
    %v340 = vsel %vm338, %v333, %v335
    %v341 = vsel %vm338, %v331, %v333
    %v342 = vsel %vm338, %v337, %v331
    %s343 = scalar_lea.vmem [#allocation5], 7
    %v344 = vld [vmem:[%s343] ss:$8 sm:$0xf]
    %v346 = vlaneseq
    %v347 = vshrl.u32 %v346, 7
    %v348 = vsub.s32 0, %v347
    %v349 = vrot.slane %v344, %v348
    %v350 = vlaneseq
    %v351 = vshrl.u32 %v350, 7
    %v352 = vsub.s32 1, %v351
    %v353 = vrot.slane %v344, %v352
    %v354 = vlaneseq
    %v355 = vshrl.u32 %v354, 7
    %v356 = vsub.s32 2, %v355
    %v357 = vrot.slane %v344, %v356
    %v358 = vlaneseq
    %v359 = vshrl.u32 %v358, 7
    %v360 = vsub.s32 3, %v359
    %v361 = vrot.slane %v344, %v360
    %v366 = vmul.f32 %v341, %v349
    %v367 = vmul.f32 %v340, %v353
    %v368 = vmul.f32 %v339, %v357
    %v369 = vmul.f32 %v342, %v361
    %370 = vrot.lane.b32.xlu0 %v81, 111
    %v371 = vpop.permute.xlu0 %370
    %372 = vrot.lane.b32.xlu0 %v85, 111
    %v373 = vpop.permute.xlu0 %372
    %374 = vrot.lane.b32.xlu0 %v82, 111
    %v375 = vpop.permute.xlu0 %374
    %376 = vrot.lane.b32.xlu0 %v86, 111
    %v377 = vpop.permute.xlu0 %376
    %vm378 = vcmp.lt.s32.totalorder %v98, 111
    %v379 = vsel %vm378, %v375, %v377
    %v380 = vsel %vm378, %v373, %v375
    %v381 = vsel %vm378, %v371, %v373
    %v382 = vsel %vm378, %v377, %v371
    %s383 = scalar_lea.vmem [#allocation5], 32
    %v384 = vld [vmem:[%s383] ss:$8 sm:$0xf]
    %v386 = vlaneseq
    %v387 = vshrl.u32 %v386, 7
    %v388 = vsub.s32 0, %v387
    %v389 = vrot.slane %v384, %v388
    %v390 = vlaneseq
    %v391 = vshrl.u32 %v390, 7
    %v392 = vsub.s32 1, %v391
    %v393 = vrot.slane %v384, %v392
    %v394 = vlaneseq
    %v395 = vshrl.u32 %v394, 7
    %v396 = vsub.s32 2, %v395
    %v397 = vrot.slane %v384, %v396
    %v398 = vlaneseq
    %v399 = vshrl.u32 %v398, 7
    %v400 = vsub.s32 3, %v399
    %v401 = vrot.slane %v384, %v400
    %v406 = vmul.f32 %v381, %v389
    %v407 = vmul.f32 %v380, %v393
    %v408 = vmul.f32 %v379, %v397
    %v409 = vmul.f32 %v382, %v401
    %v414 = vrot.slane %v166, 4
    %v415 = vrot.slane %v167, 4
    %v416 = vrot.slane %v168, 4
    %v417 = vrot.slane %v169, 4
    %v426 = vrot.slane %v246, 4
    %v427 = vrot.slane %v247, 4
    %v428 = vrot.slane %v248, 4
    %v429 = vrot.slane %v249, 4
    %v438 = vrot.slane %v286, 4
    %v439 = vrot.slane %v287, 4
    %v440 = vrot.slane %v288, 4
    %v441 = vrot.slane %v289, 4
    %v450 = vrot.slane %v366, 4
    %v451 = vrot.slane %v367, 4
    %v452 = vrot.slane %v368, 4
    %v453 = vrot.slane %v369, 4
    %vm458 = vcmask 1043456
    %v459 = vsel %vm458, %v126, %v414
    %v460 = vsel %vm458, %v127, %v415
    %v461 = vsel %vm458, %v128, %v416
    %v462 = vsel %vm458, %v129, %v417
    %v463 = vsel %vm458, %v206, %v426
    %v464 = vsel %vm458, %v207, %v427
    %v465 = vsel %vm458, %v208, %v428
    %v466 = vsel %vm458, %v209, %v429
    %v467 = vsel %vm458, %v81, %v438
    %v468 = vsel %vm458, %v85, %v439
    %v469 = vsel %vm458, %v82, %v440
    %v470 = vsel %vm458, %v86, %v441
    %v471 = vsel %vm458, %v326, %v450
    %v472 = vsel %vm458, %v327, %v451
    %v473 = vsel %vm458, %v328, %v452
    %v474 = vsel %vm458, %v329, %v453
    %v475 = vld [vmem:[%s1] sm:$0x3]
    %v476 = vpack.c.bf16 %v463, %v459
    %v477 = vpack.c.bf16 %v464, %v460
    %v478 = vpack.c.bf16 %v465, %v461
    %v479 = vpack.c.bf16 %v466, %v462
    %v480 = vpack.c.bf16 %v471, %v467
    %v481 = vpack.c.bf16 %v472, %v468
    %v482 = vpack.c.bf16 %v473, %v469
    %v483 = vpack.c.bf16 %v474, %v470
    %v484 = vpack.c.bf16 %v406, %v406
    %v485 = vpack.c.bf16 %v407, %v407
    %v486 = vpack.c.bf16 %v408, %v408
    %v487 = vpack.c.bf16 %v409, %v409
    %v488 = vld [vmem:[%s2] sm:$0xf]
    %490 = vset.pattern.permute.xlu0 0
    %491 = vperm.xlu0 %490, %v488
    %v492 = vpop.permute.xlu0 %491
    %vm494 = vcmask 293888
    %v496 = vsel %vm494, %v475, 0
    %vm498 = vcmask 1041408
    %v500 = vsel %vm498, %v484, 0
    %v503 = vsel %vm498, %v485, 0
    %v506 = vsel %vm498, %v486, 0
    %v509 = vsel %vm498, %v487, 0
    %511 = vmatprep.subr.bf16.mxu0 %v477
    %512 = vmatpush1.bf16.msra.mxu0 %v476
    %513 = vmatprep.subr.bf16.mxu0 %v481
    %514 = vmatpush1.bf16.msra.mxu0 %v480
    %515 = vmatprep.subr.bf16.mxu0 %v503
    %516 = vmatpush1.bf16.msra.mxu0 %v500
    %517 = vmatprep.subr.bf16.mxu0 0
    %518 = vmatpush1.bf16.msra.mxu0 0
    %519 = vmatprep.subr.bf16.mxu0 0
    %520 = vmatpush1.bf16.msra.mxu0 0
    %521 = vmatprep.subr.bf16.mxu0 0
    %522 = vmatpush1.bf16.msra.mxu0 0
    %523 = vmatprep.subr.bf16.mxu0 0
    %524 = vmatpush1.bf16.msra.mxu0 0
    %525 = vmatprep.subr.bf16.mxu0 0
    %526 = vmatpush1.bf16.msra.mxu0 0
    %527 = vmatprep.subr.bf16.mxu0 0
    %528 = vmatpush1.bf16.msra.mxu0 0
    %529 = vmatprep.subr.bf16.mxu0 0
    %530 = vmatpush1.bf16.msra.mxu0 0
    %531 = vmatprep.subr.bf16.mxu0 0
    %532 = vmatpush1.bf16.msra.mxu0 0
    %533 = vmatprep.subr.bf16.mxu0 0
    %534 = vmatpush1.bf16.msra.mxu0 0
    %535 = vmatprep.subr.bf16.mxu0 0
    %536 = vmatpush1.bf16.msra.mxu0 0
    %537 = vmatprep.subr.bf16.mxu0 0
    %538 = vmatpush1.bf16.msra.mxu0 0
    %539 = vmatprep.subr.bf16.mxu0 0
    %540 = vmatpush1.bf16.msra.mxu0 0
    %541 = vmatprep.subr.bf16.mxu0 0
    %542 = vmatpush1.bf16.msra.mxu0 0
    %543 = vmatprep.mubr.bf16.mxu0 0
    %544 = vmatmul.mubr.bf16.gmra.mrb[0].mxu0 %v496
    %v545 = vpop.f32.mrb[0].mxu0
    %v546 = vadd.f32 %v492, %v545
    %v547 = vpop.f32.mrb[0].mxu0
    %v548 = vadd.f32 %v492, %v547
    %v549 = vpop.f32.mrb[0].mxu0
    %v550 = vpop.f32.mrb[0].mxu0
    %551 = vdwg.mxu0
    %552 = vmatprep.subr.bf16.mxu0 %v479
    %553 = vmatpush1.bf16.msra.mxu0 %v478
    %554 = vmatprep.subr.bf16.mxu0 %v483
    %555 = vmatpush1.bf16.msra.mxu0 %v482
    %556 = vmatprep.subr.bf16.mxu0 %v509
    %557 = vmatpush1.bf16.msra.mxu0 %v506
    %558 = vmatprep.subr.bf16.mxu0 0
    %559 = vmatpush1.bf16.msra.mxu0 0
    %560 = vmatprep.subr.bf16.mxu0 0
    %561 = vmatpush1.bf16.msra.mxu0 0
    %562 = vmatprep.subr.bf16.mxu0 0
    %563 = vmatpush1.bf16.msra.mxu0 0
    %564 = vmatprep.subr.bf16.mxu0 0
    %565 = vmatpush1.bf16.msra.mxu0 0
    %566 = vmatprep.subr.bf16.mxu0 0
    %567 = vmatpush1.bf16.msra.mxu0 0
    %568 = vmatprep.subr.bf16.mxu0 0
    %569 = vmatpush1.bf16.msra.mxu0 0
    %570 = vmatprep.subr.bf16.mxu0 0
    %571 = vmatpush1.bf16.msra.mxu0 0
    %572 = vmatprep.subr.bf16.mxu0 0
    %573 = vmatpush1.bf16.msra.mxu0 0
    %574 = vmatprep.subr.bf16.mxu0 0
    %575 = vmatpush1.bf16.msra.mxu0 0
    %576 = vmatprep.subr.bf16.mxu0 0
    %577 = vmatpush1.bf16.msra.mxu0 0
    %578 = vmatprep.subr.bf16.mxu0 0
    %579 = vmatpush1.bf16.msra.mxu0 0
    %580 = vmatprep.subr.bf16.mxu0 0
    %581 = vmatpush1.bf16.msra.mxu0 0
    %582 = vmatprep.subr.bf16.mxu0 0
    %583 = vmatpush1.bf16.msra.mxu0 0
    %584 = vmatprep.mubr.bf16.mxu0 0
    %585 = vmatmul.mubr.bf16.gmra.mrb[0].mxu0 %v496
    %v586 = vpop.f32.mrb[0].mxu0
    %v587 = vadd.f32 %v492, %v586
    %v588 = vpop.f32.mrb[0].mxu0
    %v589 = vadd.f32 %v492, %v588
    %v590 = vpop.f32.mrb[0].mxu0
    %v591 = vpop.f32.mrb[0].mxu0
    %592 = vdwg.mxu0
    %v595 = vcombine.low %v546, %v548
    %597 = vst [vmem:[#allocation7] sm:$0xff] %v595
    %v600 = vcombine.low %v587, %v589
    %s602 = scalar_lea.vmem [#allocation7], 8
    %603 = vst [vmem:[%s602] sm:$0xff] %v600
    // Predicated region
    $region34: #{tpu_custom_call.1} parent=1 // pred_check
      _
    $region35: #{tpu_custom_call.1} parent=1 // pred_check_branch
      %605 = sbr.rel (0) target = $region37
    $region36: #{tpu_custom_call.1} parent=1 // pred_region
      %s607 = ssub.s32 256, 256
      %608 = vsyncadd [#allocation4], %s607
      %s609 = sshll.u32 [#allocation7], 4
      %s610 = int_to_ptr.vmem [resolvable:$true] %s609
      %615 = dma.vmem_to_hbm [thread:$0]  %s610, 256, %s6, [#allocation4], 128, 128, 8
    $region37: #{tpu_custom_call.1} parent=1 // pred_fallthru
      _
    // Predicated region
    $region38: #{tpu_custom_call.1} parent=1 // pred_check
      _
    $region39: #{tpu_custom_call.1} parent=1 // pred_check_branch
      %617 = sbr.rel (0) target = $region41
    $region40: #{tpu_custom_call.1} parent=1 // pred_region
      %618 = dma.done [#allocation4], 256
    $region41: #{tpu_custom_call.1} parent=1 // pred_fallthru
      _
    %619 = vsyncpa [#allocation3], 1
    %620 = vsyncpa [#allocation6], 1
    %621 = vsyncpa [#allocation4], 1

</llo_original>
